<compile_context>
chip_gen: v7x
topology: tpu7x:2x2x1
jax: 0.10.0
libtpu: 0.0.40
codegen_flags: <defaults>
</compile_context>

<pallas_src>
import jax
import jax.numpy as jnp
from jax.experimental import pallas as pl
from jax.experimental.pallas import tpu as pltpu

NEG_SLOPE = 0.01  # torch.nn.LeakyReLU default negative_slope
LAYER_SIZES = [(4, 100), (100, 100), (100, 10), (10, 10), (10, 2)]
N_LAYERS = len(LAYER_SIZES)
# Per-layer padded (M_out, K_in).  K_in of layer l equals M_out of layer l-1
# (layer 0's K_in equals the 8-row input slab).  Each activation's carrier row
# is its last sublane, so the next layer's bias column is its last lane.
PADDED = [(104, 8), (104, 104), (16, 104), (16, 16), (8, 16)]
X_ROWS = PADDED[0][1]     # 8   (input slab sublanes; carrier at row 7)
OUT_ROWS = PADDED[-1][0]  # 8   (output slab sublanes; rows 0..1 are Q-values)


def _leaky_relu(v):
    # max(v, a*v): 2 VPU ops instead of cmp+select+mul.
    return jnp.maximum(v, NEG_SLOPE * v)


def q_mlp_kernel(x_ref, w0, w1, w2, w3, w4, out_ref):
    # x_ref : (8, TB) f32   activations, batch on lanes, carrier at row 7
    # wN    : bf16 padded weights, resident in VMEM (constant index_map)
    # out_ref: (8, TB) f32  rows 0..1 are the Q-values, rest zero padding
    ws = (w0, w1, w2, w3, w4)
    h = x_ref[...].astype(jnp.bfloat16)
    z = None
    for l, w in enumerate(ws):
        z = jnp.dot(w[...], h, preferred_element_type=jnp.float32)
        if l < N_LAYERS - 1:
            h = _leaky_relu(z).astype(jnp.bfloat16)
    out_ref[...] = z.astype(out_ref.dtype)


def pack_params(params):
    """Pack (W, b) pairs (W: (in,out), b: (1,out)) into 5 tight bf16 slabs.

    slab_l[:out, :in]      = W_l^T
    slab_l[:out, K_pad-1]  = b_l          (bias column x carrier row)
    slab_l[M_pad-1, K_pad-1] = 1.0        (carries the ones row forward, l<4)
    """
    packed = []
    for l, (w, b) in enumerate(params):
        fin, fout = w.shape
        m_pad, k_pad = PADDED[l]
        slab = jnp.zeros((m_pad, k_pad), jnp.float32)
        slab = slab.at[:fout, :fin].set(w.T)
        slab = slab.at[:fout, k_pad - 1].set(b.reshape(-1))
        if l < N_LAYERS - 1:
            slab = slab.at[m_pad - 1, k_pad - 1].set(1.0)
        packed.append(slab.astype(jnp.bfloat16))
    return tuple(packed)


def _pick_batch_tile(b_pad):
    """Largest 128-multiple tile dividing b_pad, capped so that the grid has
    at least 2 steps when b_pad >= 256 (keeps both v7x TensorCores busy) and
    at 1024 lanes (plenty to amortize per-step overhead)."""
    if b_pad <= 128:
        return b_pad
    cap = min(1024, b_pad // 2)
    tb = 128
    cand = 256
    while cand <= cap:
        if b_pad % cand == 0:
            tb = cand
        cand += 128
    return tb


def q_forward(x, packed_weights):
    """x: (B, 4) float32; packed_weights from pack_params(). Returns (B, 2)."""
    B, fin = x.shape
    B_pad = max(128, ((B + 127) // 128) * 128)
    TB = _pick_batch_tile(B_pad)

    # (8, B_pad) input slab: features on sublanes 0..3, ones carrier at row 7.
    x_pad = jnp.zeros((X_ROWS, B_pad), jnp.float32)
    x_pad = x_pad.at[:fin, :B].set(x.T)
    x_pad = x_pad.at[X_ROWS - 1, :].set(1.0)

    # Constant index_map => weight slabs stay resident across grid steps.
    w_specs = [pl.BlockSpec(w.shape, lambda i: (0, 0)) for w in packed_weights]

    out_pad = pl.pallas_call(
        q_mlp_kernel,
        out_shape=jax.ShapeDtypeStruct((OUT_ROWS, B_pad), jnp.float32),
        grid_spec=pltpu.PrefetchScalarGridSpec(
            num_scalar_prefetch=0,
            grid=(B_pad // TB,),
            in_specs=[pl.BlockSpec((X_ROWS, TB), lambda i: (0, i))] + w_specs,
            out_specs=pl.BlockSpec((OUT_ROWS, TB), lambda i: (0, i)),
        ),
        compiler_params=pltpu.CompilerParams(
            dimension_semantics=("parallel",)),
    )(x_pad, *packed_weights)

    return out_pad[:2, :B].T


def init_params(key):
    """Deterministic init matching Q's layer shapes (PyTorch-style uniform)."""
    params = []
    for fan_in, fan_out in LAYER_SIZES:
        kw, kb, key = jax.random.split(key, 3)
        bound = 1.0 / jnp.sqrt(fan_in)
        w = jax.random.uniform(kw, (fan_in, fan_out), jnp.float32, -bound, bound)
        b = jax.random.uniform(kb, (1, fan_out), jnp.float32, -bound, bound)
        params.append((w, b))
    return params


def q_forward_ref(x, params):
    """Pure-JAX reference for correctness checking."""
    h = x
    for i, (w, b) in enumerate(params):
        h = h @ w + b
        if i < len(params) - 1:
            h = jnp.where(h > 0, h, NEG_SLOPE * h)
    return h


if __name__ == "__main__":
    key = jax.random.PRNGKey(0)
    kx, kx2, kp = jax.random.split(key, 3)

    params = init_params(kp)
    packed = pack_params(params)

    # Small batch (DQN action-selection style).
    x_small = jax.random.normal(kx, (8, 4), jnp.float32)
    out_small = jax.block_until_ready(q_forward(x_small, packed))
    ref_small = q_forward_ref(x_small, params)
    assert out_small.shape == (8, 2), out_small.shape
    # bf16 weights/activations => loosened tolerance vs the f32 reference.
    assert jnp.allclose(out_small, ref_small, atol=2e-2, rtol=2e-2), \
        "small-batch mismatch vs reference"

    # Larger batch to exercise a multi-step ("parallel") batch grid.
    x_big = jax.random.normal(kx2, (1024, 4), jnp.float32)
    out_big = jax.block_until_ready(q_forward(x_big, packed))
    ref_big = q_forward_ref(x_big, params)
    assert out_big.shape == (1024, 2), out_big.shape
    assert jnp.allclose(out_big, ref_big, atol=2e-2, rtol=2e-2), \
        "large-batch mismatch vs reference"

    print("KERNEL_OK")
</pallas_src>

<mosaic_0001>
module attributes {stable_mosaic.version = 11 : i64} {
  func.func @q_mlp_kernel(%arg0: i32, %arg1: memref<8x128xf32, #tpu.memory_space<vmem>>, %arg2: memref<104x8xbf16, #tpu.memory_space<vmem>>, %arg3: memref<104x104xbf16, #tpu.memory_space<vmem>>, %arg4: memref<16x104xbf16, #tpu.memory_space<vmem>>, %arg5: memref<16x16xbf16, #tpu.memory_space<vmem>>, %arg6: memref<8x16xbf16, #tpu.memory_space<vmem>>, %arg7: memref<8x128xf32, #tpu.memory_space<vmem>>) attributes {dimension_semantics = [#tpu.dimension_semantics<parallel>], iteration_bounds = array<i64: 1>, scalar_prefetch = 0 : i64, scratch_operands = 0 : i64, tpu.core_type = #tpu.core_type<tc>, window_params = [{transform_indices = @transform_0, window_bounds = array<i64: 8, 128>}, {pipeline_mode = #tpu.pipeline_mode<synchronous>, transform_indices = @transform_1, window_bounds = array<i64: 104, 8>}, {pipeline_mode = #tpu.pipeline_mode<synchronous>, transform_indices = @transform_2, window_bounds = array<i64: 104, 104>}, {pipeline_mode = #tpu.pipeline_mode<synchronous>, transform_indices = @transform_3, window_bounds = array<i64: 16, 104>}, {pipeline_mode = #tpu.pipeline_mode<synchronous>, transform_indices = @transform_4, window_bounds = array<i64: 16, 16>}, {pipeline_mode = #tpu.pipeline_mode<synchronous>, transform_indices = @transform_5, window_bounds = array<i64: 8, 16>}, {transform_indices = @transform_6, window_bounds = array<i64: 8, 128>}]} {
    %c0 = arith.constant 0 : index
    %c0_0 = arith.constant 0 : index
    %0 = vector.load %arg1[%c0, %c0_0] : memref<8x128xf32, #tpu.memory_space<vmem>>, vector<8x128xf32>
    %1 = arith.truncf %0 : vector<8x128xf32> to vector<8x128xbf16>
    %c0_1 = arith.constant 0 : index
    %c0_2 = arith.constant 0 : index
    %2 = vector.load %arg2[%c0_1, %c0_2] : memref<104x8xbf16, #tpu.memory_space<vmem>>, vector<104x8xbf16>
    %cst = arith.constant dense<0.000000e+00> : vector<104x128xf32>
    %3 = tpu.matmul %2, %1, %cst {dimension_numbers = #tpu.dot_dimension_numbers<[1], [0], [0], [1], [0, 0, 1, 1], [], []>} : vector<104x8xbf16>, vector<8x128xbf16>, vector<104x128xf32> -> vector<104x128xf32>
    %cst_3 = arith.constant 0.00999999977 : f32
    %4 = vector.broadcast %cst_3 : f32 to vector<104x128xf32>
    %5 = arith.mulf %4, %3 : vector<104x128xf32>
    %6 = arith.maximumf %3, %5 : vector<104x128xf32>
    %7 = arith.truncf %6 : vector<104x128xf32> to vector<104x128xbf16>
    %c0_4 = arith.constant 0 : index
    %c0_5 = arith.constant 0 : index
    %8 = vector.load %arg3[%c0_4, %c0_5] : memref<104x104xbf16, #tpu.memory_space<vmem>>, vector<104x104xbf16>
    %cst_6 = arith.constant dense<0.000000e+00> : vector<104x128xf32>
    %9 = tpu.matmul %8, %7, %cst_6 {dimension_numbers = #tpu.dot_dimension_numbers<[1], [0], [0], [1], [0, 0, 1, 1], [], []>} : vector<104x104xbf16>, vector<104x128xbf16>, vector<104x128xf32> -> vector<104x128xf32>
    %cst_7 = arith.constant 0.00999999977 : f32
    %10 = vector.broadcast %cst_7 : f32 to vector<104x128xf32>
    %11 = arith.mulf %10, %9 : vector<104x128xf32>
    %12 = arith.maximumf %9, %11 : vector<104x128xf32>
    %13 = arith.truncf %12 : vector<104x128xf32> to vector<104x128xbf16>
    %c0_8 = arith.constant 0 : index
    %c0_9 = arith.constant 0 : index
    %14 = vector.load %arg4[%c0_8, %c0_9] : memref<16x104xbf16, #tpu.memory_space<vmem>>, vector<16x104xbf16>
    %cst_10 = arith.constant dense<0.000000e+00> : vector<16x128xf32>
    %15 = tpu.matmul %14, %13, %cst_10 {dimension_numbers = #tpu.dot_dimension_numbers<[1], [0], [0], [1], [0, 0, 1, 1], [], []>} : vector<16x104xbf16>, vector<104x128xbf16>, vector<16x128xf32> -> vector<16x128xf32>
    %cst_11 = arith.constant 0.00999999977 : f32
    %16 = vector.broadcast %cst_11 : f32 to vector<16x128xf32>
    %17 = arith.mulf %16, %15 : vector<16x128xf32>
    %18 = arith.maximumf %15, %17 : vector<16x128xf32>
    %19 = arith.truncf %18 : vector<16x128xf32> to vector<16x128xbf16>
    %c0_12 = arith.constant 0 : index
    %c0_13 = arith.constant 0 : index
    %20 = vector.load %arg5[%c0_12, %c0_13] : memref<16x16xbf16, #tpu.memory_space<vmem>>, vector<16x16xbf16>
    %cst_14 = arith.constant dense<0.000000e+00> : vector<16x128xf32>
    %21 = tpu.matmul %20, %19, %cst_14 {dimension_numbers = #tpu.dot_dimension_numbers<[1], [0], [0], [1], [0, 0, 1, 1], [], []>} : vector<16x16xbf16>, vector<16x128xbf16>, vector<16x128xf32> -> vector<16x128xf32>
    %cst_15 = arith.constant 0.00999999977 : f32
    %22 = vector.broadcast %cst_15 : f32 to vector<16x128xf32>
    %23 = arith.mulf %22, %21 : vector<16x128xf32>
    %24 = arith.maximumf %21, %23 : vector<16x128xf32>
    %25 = arith.truncf %24 : vector<16x128xf32> to vector<16x128xbf16>
    %c0_16 = arith.constant 0 : index
    %c0_17 = arith.constant 0 : index
    %26 = vector.load %arg6[%c0_16, %c0_17] : memref<8x16xbf16, #tpu.memory_space<vmem>>, vector<8x16xbf16>
    %cst_18 = arith.constant dense<0.000000e+00> : vector<8x128xf32>
    %27 = tpu.matmul %26, %25, %cst_18 {dimension_numbers = #tpu.dot_dimension_numbers<[1], [0], [0], [1], [0, 0, 1, 1], [], []>} : vector<8x16xbf16>, vector<16x128xbf16>, vector<8x128xf32> -> vector<8x128xf32>
    %c0_19 = arith.constant 0 : index
    %c0_20 = arith.constant 0 : index
    %28 = vector.load %arg7[%c0_19, %c0_20] : memref<8x128xf32, #tpu.memory_space<vmem>>, vector<8x128xf32>
    tpu.vector_store %arg7[%c0_19, %c0_20], %27 {strides = array<i32>} : memref<8x128xf32, #tpu.memory_space<vmem>>, vector<8x128xf32>,
    return
  }
  func.func @transform_0(%arg0: i32) -> (i32, i32) {
    %c0_i32 = arith.constant 0 : i32
    %c0_i32_0 = arith.constant 0 : i32
    return %c0_i32, %arg0 : i32, i32
  }
  func.func @transform_1(%arg0: i32) -> (i32, i32) {
    %c0_i32 = arith.constant 0 : i32
    %c0_i32_0 = arith.constant 0 : i32
    %c0_i32_1 = arith.constant 0 : i32
    return %c0_i32, %c0_i32_0 : i32, i32
  }
  func.func @transform_2(%arg0: i32) -> (i32, i32) {
    %c0_i32 = arith.constant 0 : i32
    %c0_i32_0 = arith.constant 0 : i32
    %c0_i32_1 = arith.constant 0 : i32
    return %c0_i32, %c0_i32_0 : i32, i32
  }
  func.func @transform_3(%arg0: i32) -> (i32, i32) {
    %c0_i32 = arith.constant 0 : i32
    %c0_i32_0 = arith.constant 0 : i32
    %c0_i32_1 = arith.constant 0 : i32
    return %c0_i32, %c0_i32_0 : i32, i32
  }
  func.func @transform_4(%arg0: i32) -> (i32, i32) {
    %c0_i32 = arith.constant 0 : i32
    %c0_i32_0 = arith.constant 0 : i32
    %c0_i32_1 = arith.constant 0 : i32
    return %c0_i32, %c0_i32_0 : i32, i32
  }
  func.func @transform_5(%arg0: i32) -> (i32, i32) {
    %c0_i32 = arith.constant 0 : i32
    %c0_i32_0 = arith.constant 0 : i32
    %c0_i32_1 = arith.constant 0 : i32
    return %c0_i32, %c0_i32_0 : i32, i32
  }
  func.func @transform_6(%arg0: i32) -> (i32, i32) {
    %c0_i32 = arith.constant 0 : i32
    %c0_i32_0 = arith.constant 0 : i32
    return %c0_i32, %arg0 : i32, i32
  }
}

</mosaic_0001>

<llo_original>
// kernel: tpu_custom_call.1
$region0: #{tpu_custom_call.1}
  #allocation0 [shape = 'u32[]', space=smem, size = 0x4, offset = 0x4, fixed_abs, tag = 'smem constant byte address 0x4 - core index']
  #allocation1 [shape = 'u32[144,128]{1,0:T(1,128)}', space=vmem, size = 0x12000, scoped, tag = 'internal scratch']
  %s0 = inlined_call_operand.vmem [shape: f32[8,128], index: 0, kind: input, shape index: {}]
  %s1 = inlined_call_operand.vmem [shape: bf16[104,8], index: 1, kind: input, shape index: {}]
  %s2 = inlined_call_operand.vmem [shape: bf16[104,104], index: 2, kind: input, shape index: {}]
  %s3 = inlined_call_operand.hbm [shape: bf16[16,104], index: 3, kind: input, shape index: {}]
  %s4 = inlined_call_operand.vmem [shape: bf16[16,16], index: 4, kind: input, shape index: {}]
  %s5 = inlined_call_operand.vmem [shape: bf16[8,16], index: 5, kind: input, shape index: {}]
  %s6 = inlined_call_operand.hbm [shape: f32[8,128], index: 6, kind: output, shape index: {}]
  %s7 = sld [smem:[#allocation0]]
  $region38: #{tpu_custom_call.1} parent=0
    _
  %s9 = ssub.s32 1, %s7
  %s10 = scalar_select 0, %s9, %s7
  $region1: #{tpu_custom_call.1} parent=0
    #allocation2 [shape = 'u8[4096]{0}', space=vmem, size = 0x1000, scoped, tag = 'input window, operand 3, single buffered']
    #allocation3 [shape = 's32[1]{0}', space=sflag, size = 0x4, scoped, tag = 'scoped memory for tpu_custom_call.1']
    #allocation4 [shape = 's32[1]{0}', space=sflag, size = 0x4, scoped, tag = 'scoped memory for tpu_custom_call.1']
    #allocation5 [shape = 'u8[4096]{0}', space=vmem, size = 0x1000, scoped, tag = 'output window, operand 0, single buffered']
    %11 = vsyncpa [#allocation3], 0
    %12 = vsyncpa [#allocation4], 0
    // Predicated region
    $region2: #{tpu_custom_call.1} parent=1 // pred_check
      _
    $region3: #{tpu_custom_call.1} parent=1 // pred_check_branch
      %14 = sbr.rel (0) target = $region5
    $region4: #{tpu_custom_call.1} parent=1 // pred_region
      _
    $region5: #{tpu_custom_call.1} parent=1 // pred_fallthru
      _
    // Predicated region
    $region6: #{tpu_custom_call.1} parent=1 // pred_check
      _
    $region7: #{tpu_custom_call.1} parent=1 // pred_check_branch
      %16 = sbr.rel (0) target = $region9
    $region8: #{tpu_custom_call.1} parent=1 // pred_region
      _
    $region9: #{tpu_custom_call.1} parent=1 // pred_fallthru
      _
    // Predicated region
    $region10: #{tpu_custom_call.1} parent=1 // pred_check
      _
    $region11: #{tpu_custom_call.1} parent=1 // pred_check_branch
      %18 = sbr.rel (0) target = $region13
    $region12: #{tpu_custom_call.1} parent=1 // pred_region
      _
    $region13: #{tpu_custom_call.1} parent=1 // pred_fallthru
      _
    // Predicated region
    $region14: #{tpu_custom_call.1} parent=1 // pred_check
      _
    $region15: #{tpu_custom_call.1} parent=1 // pred_check_branch
      %20 = sbr.rel (0) target = $region17
    $region16: #{tpu_custom_call.1} parent=1 // pred_region
      %s22 = ssub.s32 128, 128
      %23 = vsyncadd [#allocation3], %s22
      %s24 = sshll.u32 [#allocation2], 4
      %s25 = int_to_ptr.vmem [resolvable:$true] %s24
      %30 = dma.hbm_to_vmem [thread:$0]  %s3, 128, %s25, [#allocation3], 64, 64, 4
    $region17: #{tpu_custom_call.1} parent=1 // pred_fallthru
      _
    // Predicated region
    $region18: #{tpu_custom_call.1} parent=1 // pred_check
      _
    $region19: #{tpu_custom_call.1} parent=1 // pred_check_branch
      %32 = sbr.rel (0) target = $region21
    $region20: #{tpu_custom_call.1} parent=1 // pred_region
      _
    $region21: #{tpu_custom_call.1} parent=1 // pred_fallthru
      _
    // Predicated region
    $region22: #{tpu_custom_call.1} parent=1 // pred_check
      _
    $region23: #{tpu_custom_call.1} parent=1 // pred_check_branch
      %34 = sbr.rel (0) target = $region25
    $region24: #{tpu_custom_call.1} parent=1 // pred_region
      _
    $region25: #{tpu_custom_call.1} parent=1 // pred_fallthru
      _
    // Predicated region
    $region26: #{tpu_custom_call.1} parent=1 // pred_check
      _
    $region27: #{tpu_custom_call.1} parent=1 // pred_check_branch
      %36 = sbr.rel (0) target = $region29
    $region28: #{tpu_custom_call.1} parent=1 // pred_region
      %37 = dma.done [#allocation3], 128
    $region29: #{tpu_custom_call.1} parent=1 // pred_fallthru
      _
    %v39 = vld [vmem:[%s0] sm:$0xff]
    %v40 = vpack.c.bf16 %v39, %v39
    %v41 = vld [vmem:[%s1] sm:$0xf]
    %v42 = vld [vmem:[%s1 + $0x4] sm:$0xf]
    %v43 = vld [vmem:[%s1 + $0x8] sm:$0xf]
    %v44 = vld [vmem:[%s1 + $0xc] sm:$0xf]
    %v45 = vld [vmem:[%s1 + $0x10] sm:$0xf]
    %v46 = vld [vmem:[%s1 + $0x14] sm:$0xf]
    %v47 = vld [vmem:[%s1 + $0x18] sm:$0xf]
    %v48 = vld [vmem:[%s1 + $0x1c] sm:$0xf]
    %v49 = vld [vmem:[%s1 + $0x20] sm:$0xf]
    %v50 = vld [vmem:[%s1 + $0x24] sm:$0xf]
    %v51 = vld [vmem:[%s1 + $0x28] sm:$0xf]
    %v52 = vld [vmem:[%s1 + $0x2c] sm:$0xf]
    %v53 = vld [vmem:[%s1 + $0x30] sm:$0xf]
    %v67 = vunpack.c.l.b16 %v41
    %v68 = vunpack.c.l.b16 %v42
    %v69 = vunpack.c.l.b16 %v43
    %v70 = vunpack.c.l.b16 %v44
    %v71 = vunpack.c.l.b16 %v45
    %v72 = vunpack.c.l.b16 %v46
    %v73 = vunpack.c.l.b16 %v47
    %v74 = vunpack.c.l.b16 %v48
    %v75 = vunpack.c.l.b16 %v49
    %v76 = vunpack.c.l.b16 %v50
    %v77 = vunpack.c.l.b16 %v51
    %v78 = vunpack.c.l.b16 %v52
    %v79 = vunpack.c.l.b16 %v53
    %v80 = vpack.c.b16 %v68, %v67
    %v81 = vpack.c.b16 %v70, %v69
    %v82 = vpack.c.b16 %v72, %v71
    %v83 = vpack.c.b16 %v74, %v73
    %v84 = vpack.c.b16 %v76, %v75
    %v85 = vpack.c.b16 %v78, %v77
    %v86 = vpack.c.b16 %v79, %v79
    %vm87 = vcmask 64512
    %v89 = vsel %vm87, %v80, 0
    %v92 = vsel %vm87, %v81, 0
    %v95 = vsel %vm87, %v82, 0
    %v98 = vsel %vm87, %v83, 0
    %v101 = vsel %vm87, %v84, 0
    %v104 = vsel %vm87, %v85, 0
    %v107 = vsel %vm87, %v86, 0
    %vm109 = vcmask 1043456
    %v111 = vsel %vm109, %v40, 0
    %113 = vmatprep.subr.bf16.mxu0 0
    %114 = vmatpush1.bf16.msra.mxu0 %v111
    %115 = vmatprep.subr.bf16.mxu0 0
    %116 = vmatpush1.bf16.msra.mxu0 0
    %117 = vmatprep.subr.bf16.mxu0 0
    %118 = vmatpush1.bf16.msra.mxu0 0
    %119 = vmatprep.subr.bf16.mxu0 0
    %120 = vmatpush1.bf16.msra.mxu0 0
    %121 = vmatprep.subr.bf16.mxu0 0
    %122 = vmatpush1.bf16.msra.mxu0 0
    %123 = vmatprep.subr.bf16.mxu0 0
    %124 = vmatpush1.bf16.msra.mxu0 0
    %125 = vmatprep.subr.bf16.mxu0 0
    %126 = vmatpush1.bf16.msra.mxu0 0
    %127 = vmatprep.subr.bf16.mxu0 0
    %128 = vmatpush1.bf16.msra.mxu0 0
    %129 = vmatprep.subr.bf16.mxu0 0
    %130 = vmatpush1.bf16.msra.mxu0 0
    %131 = vmatprep.subr.bf16.mxu0 0
    %132 = vmatpush1.bf16.msra.mxu0 0
    %133 = vmatprep.subr.bf16.mxu0 0
    %134 = vmatpush1.bf16.msra.mxu0 0
    %135 = vmatprep.subr.bf16.mxu0 0
    %136 = vmatpush1.bf16.msra.mxu0 0
    %137 = vmatprep.subr.bf16.mxu0 0
    %138 = vmatpush1.bf16.msra.mxu0 0
    %139 = vmatprep.subr.bf16.mxu0 0
    %140 = vmatpush1.bf16.msra.mxu0 0
    %141 = vmatprep.subr.bf16.mxu0 0
    %142 = vmatpush1.bf16.msra.mxu0 0
    %143 = vmatprep.subr.bf16.mxu0 0
    %144 = vmatpush1.bf16.msra.mxu0 0
    %145 = vmatprep.mubr.bf16.mxu0 0
    %146 = vmatmul.mubr.bf16.gmra.mrb[0].mxu0 %v89
    %v147 = vpop.f32.mrb[0].mxu0
    %v148 = vadd.f32 0.0, %v147
    %v149 = vpop.f32.mrb[0].mxu0
    %v150 = vpop.f32.mrb[0].mxu0
    %v151 = vadd.f32 0.0, %v150
    %v152 = vpop.f32.mrb[0].mxu0
    %153 = vmatprep.mubr.bf16.mxu0 0
    %154 = vmatmul.mubr.bf16.gmra.mrb[0].mxu0 %v92
    %v155 = vpop.f32.mrb[0].mxu0
    %v156 = vadd.f32 0.0, %v155
    %v157 = vpop.f32.mrb[0].mxu0
    %v158 = vpop.f32.mrb[0].mxu0
    %v159 = vadd.f32 0.0, %v158
    %v160 = vpop.f32.mrb[0].mxu0
    %161 = vmatprep.mubr.bf16.mxu0 0
    %162 = vmatmul.mubr.bf16.gmra.mrb[0].mxu0 %v95
    %v163 = vpop.f32.mrb[0].mxu0
    %v164 = vadd.f32 0.0, %v163
    %v165 = vpop.f32.mrb[0].mxu0
    %v166 = vpop.f32.mrb[0].mxu0
    %v167 = vadd.f32 0.0, %v166
    %v168 = vpop.f32.mrb[0].mxu0
    %169 = vmatprep.mubr.bf16.mxu0 0
    %170 = vmatmul.mubr.bf16.gmra.mrb[0].mxu0 %v98
    %v171 = vpop.f32.mrb[0].mxu0
    %v172 = vadd.f32 0.0, %v171
    %v173 = vpop.f32.mrb[0].mxu0
    %v174 = vpop.f32.mrb[0].mxu0
    %v175 = vadd.f32 0.0, %v174
    %v176 = vpop.f32.mrb[0].mxu0
    %177 = vmatprep.mubr.bf16.mxu0 0
    %178 = vmatmul.mubr.bf16.gmra.mrb[0].mxu0 %v101
    %v179 = vpop.f32.mrb[0].mxu0
    %v180 = vadd.f32 0.0, %v179
    %v181 = vpop.f32.mrb[0].mxu0
    %v182 = vpop.f32.mrb[0].mxu0
    %v183 = vadd.f32 0.0, %v182
    %v184 = vpop.f32.mrb[0].mxu0
    %185 = vmatprep.mubr.bf16.mxu0 0
    %186 = vmatmul.mubr.bf16.gmra.mrb[0].mxu0 %v104
    %v187 = vpop.f32.mrb[0].mxu0
    %v188 = vadd.f32 0.0, %v187
    %v189 = vpop.f32.mrb[0].mxu0
    %v190 = vpop.f32.mrb[0].mxu0
    %v191 = vadd.f32 0.0, %v190
    %v192 = vpop.f32.mrb[0].mxu0
    %193 = vmatprep.mubr.bf16.mxu0 0
    %194 = vmatmul.mubr.bf16.gmra.mrb[0].mxu0 %v107
    %v195 = vpop.f32.mrb[0].mxu0
    %v196 = vadd.f32 0.0, %v195
    %v197 = vpop.f32.mrb[0].mxu0
    %v198 = vpop.f32.mrb[0].mxu0
    %v199 = vpop.f32.mrb[0].mxu0
    %200 = vdwg.mxu0
    %v201 = vmul.f32 %v148, 0.01
    %v202 = vmul.f32 %v151, 0.01
    %v203 = vmul.f32 %v156, 0.01
    %v204 = vmul.f32 %v159, 0.01
    %v205 = vmul.f32 %v164, 0.01
    %v206 = vmul.f32 %v167, 0.01
    %v207 = vmul.f32 %v172, 0.01
    %v208 = vmul.f32 %v175, 0.01
    %v209 = vmul.f32 %v180, 0.01
    %v210 = vmul.f32 %v183, 0.01
    %v211 = vmul.f32 %v188, 0.01
    %v212 = vmul.f32 %v191, 0.01
    %v213 = vmul.f32 %v196, 0.01
    %v214 = vmax.f32 %v148, %v201
    %v215 = vmax.f32 %v151, %v202
    %v216 = vmax.f32 %v156, %v203
    %v217 = vmax.f32 %v159, %v204
    %v218 = vmax.f32 %v164, %v205
    %v219 = vmax.f32 %v167, %v206
    %v220 = vmax.f32 %v172, %v207
    %v221 = vmax.f32 %v175, %v208
    %v222 = vmax.f32 %v180, %v209
    %v223 = vmax.f32 %v183, %v210
    %v224 = vmax.f32 %v188, %v211
    %v225 = vmax.f32 %v191, %v212
    %v226 = vmax.f32 %v196, %v213
    %v227 = vpack.c.bf16 %v215, %v214
    %v228 = vpack.c.bf16 %v217, %v216
    %v229 = vpack.c.bf16 %v219, %v218
    %v230 = vpack.c.bf16 %v221, %v220
    %v231 = vpack.c.bf16 %v223, %v222
    %v232 = vpack.c.bf16 %v225, %v224
    %v233 = vpack.c.bf16 %v226, %v226
    %v234 = vld [vmem:[%s2] sm:$0xf]
    %v235 = vld [vmem:[%s2 + $0x4] sm:$0xf]
    %v236 = vld [vmem:[%s2 + $0x8] sm:$0xf]
    %v237 = vld [vmem:[%s2 + $0xc] sm:$0xf]
    %v238 = vld [vmem:[%s2 + $0x10] sm:$0xf]
    %v239 = vld [vmem:[%s2 + $0x14] sm:$0xf]
    %v240 = vld [vmem:[%s2 + $0x18] sm:$0xf]
    %v241 = vld [vmem:[%s2 + $0x1c] sm:$0xf]
    %v242 = vld [vmem:[%s2 + $0x20] sm:$0xf]
    %v243 = vld [vmem:[%s2 + $0x24] sm:$0xf]
    %v244 = vld [vmem:[%s2 + $0x28] sm:$0xf]
    %v245 = vld [vmem:[%s2 + $0x2c] sm:$0xf]
    %v246 = vld [vmem:[%s2 + $0x30] sm:$0xf]
    %v260 = vunpack.c.l.b16 %v234
    %v261 = vunpack.c.l.b16 %v235
    %v262 = vunpack.c.l.b16 %v236
    %v263 = vunpack.c.l.b16 %v237
    %v264 = vunpack.c.l.b16 %v238
    %v265 = vunpack.c.l.b16 %v239
    %v266 = vunpack.c.l.b16 %v240
    %v267 = vunpack.c.l.b16 %v241
    %v268 = vunpack.c.l.b16 %v242
    %v269 = vunpack.c.l.b16 %v243
    %v270 = vunpack.c.l.b16 %v244
    %v271 = vunpack.c.l.b16 %v245
    %v272 = vunpack.c.l.b16 %v246
    %v273 = vpack.c.b16 %v261, %v260
    %v274 = vpack.c.b16 %v263, %v262
    %v275 = vpack.c.b16 %v265, %v264
    %v276 = vpack.c.b16 %v267, %v266
    %v277 = vpack.c.b16 %v269, %v268
    %v278 = vpack.c.b16 %v271, %v270
    %v279 = vpack.c.b16 %v272, %v272
    %vm280 = vcmask 850944
    %v282 = vsel %vm280, %v273, 0
    %v285 = vsel %vm280, %v274, 0
    %v288 = vsel %vm280, %v275, 0
    %v291 = vsel %vm280, %v276, 0
    %v294 = vsel %vm280, %v277, 0
    %v297 = vsel %vm280, %v278, 0
    %v300 = vsel %vm280, %v279, 0
    %v303 = vsel %vm109, %v233, 0
    %305 = vmatprep.subr.bf16.mxu0 0
    %306 = vmatpush1.bf16.msra.mxu0 %v227
    %307 = vmatprep.subr.bf16.mxu0 0
    %308 = vmatpush1.bf16.msra.mxu0 %v228
    %309 = vmatprep.subr.bf16.mxu0 0
    %310 = vmatpush1.bf16.msra.mxu0 %v229
    %311 = vmatprep.subr.bf16.mxu0 0
    %312 = vmatpush1.bf16.msra.mxu0 %v230
    %313 = vmatprep.subr.bf16.mxu0 0
    %314 = vmatpush1.bf16.msra.mxu0 %v231
    %315 = vmatprep.subr.bf16.mxu0 0
    %316 = vmatpush1.bf16.msra.mxu0 %v232
    %317 = vmatprep.subr.bf16.mxu0 0
    %318 = vmatpush1.bf16.msra.mxu0 %v303
    %319 = vmatprep.subr.bf16.mxu0 0
    %320 = vmatpush1.bf16.msra.mxu0 0
    %321 = vmatprep.subr.bf16.mxu0 0
    %322 = vmatpush1.bf16.msra.mxu0 0
    %323 = vmatprep.subr.bf16.mxu0 0
    %324 = vmatpush1.bf16.msra.mxu0 0
    %325 = vmatprep.subr.bf16.mxu0 0
    %326 = vmatpush1.bf16.msra.mxu0 0
    %327 = vmatprep.subr.bf16.mxu0 0
    %328 = vmatpush1.bf16.msra.mxu0 0
    %329 = vmatprep.subr.bf16.mxu0 0
    %330 = vmatpush1.bf16.msra.mxu0 0
    %331 = vmatprep.subr.bf16.mxu0 0
    %332 = vmatpush1.bf16.msra.mxu0 0
    %333 = vmatprep.subr.bf16.mxu0 0
    %334 = vmatpush1.bf16.msra.mxu0 0
    %335 = vmatprep.subr.bf16.mxu0 0
    %336 = vmatpush1.bf16.msra.mxu0 0
    %337 = vmatprep.mubr.bf16.mxu0 0
    %338 = vmatmul.mubr.bf16.gmra.mrb[0].mxu0 %v282
    %v339 = vpop.f32.mrb[0].mxu0
    %v340 = vadd.f32 0.0, %v339
    %v341 = vpop.f32.mrb[0].mxu0
    %v342 = vpop.f32.mrb[0].mxu0
    %v343 = vadd.f32 0.0, %v342
    %v344 = vpop.f32.mrb[0].mxu0
    %345 = vmatprep.mubr.bf16.mxu0 0
    %346 = vmatmul.mubr.bf16.gmra.mrb[0].mxu0 %v285
    %v347 = vpop.f32.mrb[0].mxu0
    %v348 = vadd.f32 0.0, %v347
    %v349 = vpop.f32.mrb[0].mxu0
    %v350 = vpop.f32.mrb[0].mxu0
    %v351 = vadd.f32 0.0, %v350
    %v352 = vpop.f32.mrb[0].mxu0
    %353 = vmatprep.mubr.bf16.mxu0 0
    %354 = vmatmul.mubr.bf16.gmra.mrb[0].mxu0 %v288
    %v355 = vpop.f32.mrb[0].mxu0
    %v356 = vadd.f32 0.0, %v355
    %v357 = vpop.f32.mrb[0].mxu0
    %v358 = vpop.f32.mrb[0].mxu0
    %v359 = vadd.f32 0.0, %v358
    %v360 = vpop.f32.mrb[0].mxu0
    %361 = vmatprep.mubr.bf16.mxu0 0
    %362 = vmatmul.mubr.bf16.gmra.mrb[0].mxu0 %v291
    %v363 = vpop.f32.mrb[0].mxu0
    %v364 = vadd.f32 0.0, %v363
    %v365 = vpop.f32.mrb[0].mxu0
    %v366 = vpop.f32.mrb[0].mxu0
    %v367 = vadd.f32 0.0, %v366
    %v368 = vpop.f32.mrb[0].mxu0
    %369 = vmatprep.mubr.bf16.mxu0 0
    %370 = vmatmul.mubr.bf16.gmra.mrb[0].mxu0 %v294
    %v371 = vpop.f32.mrb[0].mxu0
    %v372 = vadd.f32 0.0, %v371
    %v373 = vpop.f32.mrb[0].mxu0
    %v374 = vpop.f32.mrb[0].mxu0
    %v375 = vadd.f32 0.0, %v374
    %v376 = vpop.f32.mrb[0].mxu0
    %377 = vmatprep.mubr.bf16.mxu0 0
    %378 = vmatmul.mubr.bf16.gmra.mrb[0].mxu0 %v297
    %v379 = vpop.f32.mrb[0].mxu0
    %v380 = vadd.f32 0.0, %v379
    %v381 = vpop.f32.mrb[0].mxu0
    %v382 = vpop.f32.mrb[0].mxu0
    %v383 = vadd.f32 0.0, %v382
    %v384 = vpop.f32.mrb[0].mxu0
    %385 = vmatprep.mubr.bf16.mxu0 0
    %386 = vmatmul.mubr.bf16.gmra.mrb[0].mxu0 %v300
    %v387 = vpop.f32.mrb[0].mxu0
    %v388 = vadd.f32 0.0, %v387
    %v389 = vpop.f32.mrb[0].mxu0
    %v390 = vpop.f32.mrb[0].mxu0
    %v391 = vpop.f32.mrb[0].mxu0
    %392 = vdwg.mxu0
    %v393 = vmul.f32 %v340, 0.01
    %v394 = vmul.f32 %v343, 0.01
    %v395 = vmul.f32 %v348, 0.01
    %v396 = vmul.f32 %v351, 0.01
    %v397 = vmul.f32 %v356, 0.01
    %v398 = vmul.f32 %v359, 0.01
    %v399 = vmul.f32 %v364, 0.01
    %v400 = vmul.f32 %v367, 0.01
    %v401 = vmul.f32 %v372, 0.01
    %v402 = vmul.f32 %v375, 0.01
    %v403 = vmul.f32 %v380, 0.01
    %v404 = vmul.f32 %v383, 0.01
    %v405 = vmul.f32 %v388, 0.01
    %v406 = vmax.f32 %v340, %v393
    %v407 = vmax.f32 %v343, %v394
    %v408 = vmax.f32 %v348, %v395
    %v409 = vmax.f32 %v351, %v396
    %v410 = vmax.f32 %v356, %v397
    %v411 = vmax.f32 %v359, %v398
    %v412 = vmax.f32 %v364, %v399
    %v413 = vmax.f32 %v367, %v400
    %v414 = vmax.f32 %v372, %v401
    %v415 = vmax.f32 %v375, %v402
    %v416 = vmax.f32 %v380, %v403
    %v417 = vmax.f32 %v383, %v404
    %v418 = vmax.f32 %v388, %v405
    %v419 = vpack.c.bf16 %v407, %v406
    %v420 = vpack.c.bf16 %v409, %v408
    %v421 = vpack.c.bf16 %v411, %v410
    %v422 = vpack.c.bf16 %v413, %v412
    %v423 = vpack.c.bf16 %v415, %v414
    %v424 = vpack.c.bf16 %v417, %v416
    %v425 = vpack.c.bf16 %v418, %v418
    %v426 = vld [vmem:[#allocation2] sm:$0xf]
    %v427 = vld [vmem:[#allocation2 + $0x4] sm:$0xf]
    %v430 = vunpack.c.l.b16 %v426
    %v431 = vunpack.c.l.b16 %v427
    %v432 = vpack.c.b16 %v431, %v430
    %v434 = vsel %vm280, %v432, 0
    %v437 = vsel %vm109, %v425, 0
    %439 = vmatprep.subr.bf16.mxu0 0
    %440 = vmatpush1.bf16.msra.mxu0 %v419
    %441 = vmatprep.subr.bf16.mxu0 0
    %442 = vmatpush1.bf16.msra.mxu0 %v420
    %443 = vmatprep.subr.bf16.mxu0 0
    %444 = vmatpush1.bf16.msra.mxu0 %v421
    %445 = vmatprep.subr.bf16.mxu0 0
    %446 = vmatpush1.bf16.msra.mxu0 %v422
    %447 = vmatprep.subr.bf16.mxu0 0
    %448 = vmatpush1.bf16.msra.mxu0 %v423
    %449 = vmatprep.subr.bf16.mxu0 0
    %450 = vmatpush1.bf16.msra.mxu0 %v424
    %451 = vmatprep.subr.bf16.mxu0 0
    %452 = vmatpush1.bf16.msra.mxu0 %v437
    %453 = vmatprep.subr.bf16.mxu0 0
    %454 = vmatpush1.bf16.msra.mxu0 0
    %455 = vmatprep.subr.bf16.mxu0 0
    %456 = vmatpush1.bf16.msra.mxu0 0
    %457 = vmatprep.subr.bf16.mxu0 0
    %458 = vmatpush1.bf16.msra.mxu0 0
    %459 = vmatprep.subr.bf16.mxu0 0
    %460 = vmatpush1.bf16.msra.mxu0 0
    %461 = vmatprep.subr.bf16.mxu0 0
    %462 = vmatpush1.bf16.msra.mxu0 0
    %463 = vmatprep.subr.bf16.mxu0 0
    %464 = vmatpush1.bf16.msra.mxu0 0
    %465 = vmatprep.subr.bf16.mxu0 0
    %466 = vmatpush1.bf16.msra.mxu0 0
    %467 = vmatprep.subr.bf16.mxu0 0
    %468 = vmatpush1.bf16.msra.mxu0 0
    %469 = vmatprep.subr.bf16.mxu0 0
    %470 = vmatpush1.bf16.msra.mxu0 0
    %471 = vmatprep.mubr.bf16.mxu0 0
    %472 = vmatmul.mubr.bf16.gmra.mrb[0].mxu0 %v434
    %v473 = vpop.f32.mrb[0].mxu0
    %v474 = vadd.f32 0.0, %v473
    %v475 = vpop.f32.mrb[0].mxu0
    %v476 = vpop.f32.mrb[0].mxu0
    %v477 = vadd.f32 0.0, %v476
    %v478 = vpop.f32.mrb[0].mxu0
    %479 = vdwg.mxu0
    %v480 = vmul.f32 %v474, 0.01
    %v481 = vmul.f32 %v477, 0.01
    %v482 = vmax.f32 %v474, %v480
    %v483 = vmax.f32 %v477, %v481
    %v484 = vpack.c.bf16 %v483, %v482
    %v485 = vld [vmem:[%s4] sm:$0xf]
    %v486 = vld [vmem:[%s4 + $0x4] sm:$0xf]
    %v489 = vunpack.c.l.b16 %v485
    %v490 = vunpack.c.l.b16 %v486
    %v491 = vpack.c.b16 %v490, %v489
    %vm492 = vcmask 130048
    %v494 = vsel %vm492, %v491, 0
    %496 = vmatprep.subr.bf16.mxu0 0
    %497 = vmatpush1.bf16.msra.mxu0 %v484
    %498 = vmatprep.subr.bf16.mxu0 0
    %499 = vmatpush1.bf16.msra.mxu0 0
    %500 = vmatprep.subr.bf16.mxu0 0
    %501 = vmatpush1.bf16.msra.mxu0 0
    %502 = vmatprep.subr.bf16.mxu0 0
    %503 = vmatpush1.bf16.msra.mxu0 0
    %504 = vmatprep.subr.bf16.mxu0 0
    %505 = vmatpush1.bf16.msra.mxu0 0
    %506 = vmatprep.subr.bf16.mxu0 0
    %507 = vmatpush1.bf16.msra.mxu0 0
    %508 = vmatprep.subr.bf16.mxu0 0
    %509 = vmatpush1.bf16.msra.mxu0 0
    %510 = vmatprep.subr.bf16.mxu0 0
    %511 = vmatpush1.bf16.msra.mxu0 0
    %512 = vmatprep.subr.bf16.mxu0 0
    %513 = vmatpush1.bf16.msra.mxu0 0
    %514 = vmatprep.subr.bf16.mxu0 0
    %515 = vmatpush1.bf16.msra.mxu0 0
    %516 = vmatprep.subr.bf16.mxu0 0
    %517 = vmatpush1.bf16.msra.mxu0 0
    %518 = vmatprep.subr.bf16.mxu0 0
    %519 = vmatpush1.bf16.msra.mxu0 0
    %520 = vmatprep.subr.bf16.mxu0 0
    %521 = vmatpush1.bf16.msra.mxu0 0
    %522 = vmatprep.subr.bf16.mxu0 0
    %523 = vmatpush1.bf16.msra.mxu0 0
    %524 = vmatprep.subr.bf16.mxu0 0
    %525 = vmatpush1.bf16.msra.mxu0 0
    %526 = vmatprep.subr.bf16.mxu0 0
    %527 = vmatpush1.bf16.msra.mxu0 0
    %528 = vmatprep.mubr.bf16.mxu0 0
    %529 = vmatmul.mubr.bf16.gmra.mrb[0].mxu0 %v494
    %v530 = vpop.f32.mrb[0].mxu0
    %v531 = vadd.f32 0.0, %v530
    %v532 = vpop.f32.mrb[0].mxu0
    %v533 = vpop.f32.mrb[0].mxu0
    %v534 = vadd.f32 0.0, %v533
    %v535 = vpop.f32.mrb[0].mxu0
    %536 = vdwg.mxu0
    %v537 = vmul.f32 %v531, 0.01
    %v538 = vmul.f32 %v534, 0.01
    %v539 = vmax.f32 %v531, %v537
    %v540 = vmax.f32 %v534, %v538
    %v541 = vpack.c.bf16 %v540, %v539
    %v542 = vld [vmem:[%s5] sm:$0xf]
    %v544 = vsel %vm492, %v542, 0
    %546 = vmatprep.subr.bf16.mxu0 0
    %547 = vmatpush1.bf16.msra.mxu0 %v541
    %548 = vmatprep.subr.bf16.mxu0 0
    %549 = vmatpush1.bf16.msra.mxu0 0
    %550 = vmatprep.subr.bf16.mxu0 0
    %551 = vmatpush1.bf16.msra.mxu0 0
    %552 = vmatprep.subr.bf16.mxu0 0
    %553 = vmatpush1.bf16.msra.mxu0 0
    %554 = vmatprep.subr.bf16.mxu0 0
    %555 = vmatpush1.bf16.msra.mxu0 0
    %556 = vmatprep.subr.bf16.mxu0 0
    %557 = vmatpush1.bf16.msra.mxu0 0
    %558 = vmatprep.subr.bf16.mxu0 0
    %559 = vmatpush1.bf16.msra.mxu0 0
    %560 = vmatprep.subr.bf16.mxu0 0
    %561 = vmatpush1.bf16.msra.mxu0 0
    %562 = vmatprep.subr.bf16.mxu0 0
    %563 = vmatpush1.bf16.msra.mxu0 0
    %564 = vmatprep.subr.bf16.mxu0 0
    %565 = vmatpush1.bf16.msra.mxu0 0
    %566 = vmatprep.subr.bf16.mxu0 0
    %567 = vmatpush1.bf16.msra.mxu0 0
    %568 = vmatprep.subr.bf16.mxu0 0
    %569 = vmatpush1.bf16.msra.mxu0 0
    %570 = vmatprep.subr.bf16.mxu0 0
    %571 = vmatpush1.bf16.msra.mxu0 0
    %572 = vmatprep.subr.bf16.mxu0 0
    %573 = vmatpush1.bf16.msra.mxu0 0
    %574 = vmatprep.subr.bf16.mxu0 0
    %575 = vmatpush1.bf16.msra.mxu0 0
    %576 = vmatprep.subr.bf16.mxu0 0
    %577 = vmatpush1.bf16.msra.mxu0 0
    %578 = vmatprep.mubr.bf16.mxu0 0
    %579 = vmatmul.mubr.bf16.gmra.mrb[0].mxu0 %v544
    %v580 = vpop.f32.mrb[0].mxu0
    %v581 = vadd.f32 0.0, %v580
    %v582 = vpop.f32.mrb[0].mxu0
    %v583 = vpop.f32.mrb[0].mxu0
    %v584 = vpop.f32.mrb[0].mxu0
    %585 = vdwg.mxu0
    %586 = vst [vmem:[#allocation5] sm:$0xff] %v581
    // Predicated region
    $region30: #{tpu_custom_call.1} parent=1 // pred_check
      _
    $region31: #{tpu_custom_call.1} parent=1 // pred_check_branch
      %588 = sbr.rel (0) target = $region33
    $region32: #{tpu_custom_call.1} parent=1 // pred_region
      %s590 = ssub.s32 128, 128
      %591 = vsyncadd [#allocation4], %s590
      %s593 = sshll.u32 [#allocation5], 4
      %s594 = int_to_ptr.vmem [resolvable:$true] %s593
      %596 = dma.vmem_to_hbm [thread:$0]  %s594, 128, %s6, [#allocation4]
    $region33: #{tpu_custom_call.1} parent=1 // pred_fallthru
      _
    // Predicated region
    $region34: #{tpu_custom_call.1} parent=1 // pred_check
      _
    $region35: #{tpu_custom_call.1} parent=1 // pred_check_branch
      %598 = sbr.rel (0) target = $region37
    $region36: #{tpu_custom_call.1} parent=1 // pred_region
      %599 = dma.done [#allocation4], 128
    $region37: #{tpu_custom_call.1} parent=1 // pred_fallthru
      _
    %600 = vsyncpa [#allocation3], 1
    %601 = vsyncpa [#allocation4], 1

</llo_original>
